<compile_context>
chip_gen: v7x
topology: tpu7x:2x2x1
jax: 0.10.0
libtpu: 0.0.40
codegen_flags: <defaults>
</compile_context>

<pallas_src>
import jax
import jax.numpy as jnp
from jax.experimental import pallas as pl
from jax.experimental.pallas import tpu as pltpu


def _round_up(x, m):
    return (x + m - 1) // m * m


def _patch_embed_kernel(p_ref, w_ref, b_ref, o_ref):
    # p_ref: (tm, K8)  w_ref: (K8, tn)  b_ref: (1, tn)  o_ref: (tm, tn)
    acc = jnp.dot(p_ref[...], w_ref[...], preferred_element_type=jnp.float32)
    o_ref[...] = (acc + b_ref[...]).astype(o_ref.dtype)


def _extract_patches(x, kernel_size, stride):
    """x (B,C,H,W) -> (B*T, K), K flattened in (c, kh, kw) order."""
    B, C, H, W = x.shape
    kh, kw = kernel_size
    sh, sw = stride
    th = (H - kh) // sh + 1
    tw = (W - kw) // sw + 1
    T = th * tw
    K = C * kh * kw
    if sh == kh and sw == kw and H % kh == 0 and W % kw == 0:
        # Non-overlapping covering patches: pure reshape/transpose (fusible).
        p = x.reshape(B, C, th, kh, tw, kw)
        p = p.transpose(0, 2, 4, 1, 3, 5)             # (B, th, tw, C, kh, kw)
    else:
        # Overlapping / cropped case: one vectorized gather.
        ii = (jnp.arange(th) * sh)[:, None, None, None] \
            + jnp.arange(kh)[None, None, :, None]      # (th, 1, kh, 1)
        jj = (jnp.arange(tw) * sw)[None, :, None, None] \
            + jnp.arange(kw)[None, None, None, :]      # (1, tw, 1, kw)
        p = x[:, :, ii, jj]                            # (B, C, th, tw, kh, kw)
        p = p.transpose(0, 2, 3, 1, 4, 5)              # (B, th, tw, C, kh, kw)
    return p.reshape(B * T, K), T, K


def _vmem_budget_bytes():
    """~65% of physical VMEM (headroom for Mosaic internals/semaphores)."""
    phys = 64 * 1024 * 1024                # conservative default (v7x per-TC)
    try:
        info = pltpu.get_tpu_info()
        phys = int(getattr(info, "vmem_capacity_bytes", phys))
    except Exception:
        pass
    return int(phys * 0.65)                # v7x ~41 MiB; v5e/v6e ~83 MiB


def _pick_tiles(M, K8, EP, in_item, out_item, budget):
    """Choose (tm, tn): tn | EP (multiple of 128), tm multiple of 8."""
    M8 = _round_up(M, 8)

    # --- EP tile: full embed dim when the single-buffered weight tile is
    # cheap; otherwise bound it to ~1/3 of the VMEM budget. ---
    tn = 128
    for cand in (EP, 1024, 512, 256, 128):
        if cand <= EP and EP % cand == 0:
            tn = cand
            if K8 * cand * in_item <= budget // 3:
                break

    # --- M tile: as many rows as VMEM allows (<= 1024), preferring a
    # multiple-of-8 divisor of the token count so Mp == M (no padding). ---
    fixed = K8 * tn * in_item + 8 * tn * 4            # weight (1 buf) + bias
    per_row = 2 * K8 * in_item + 2 * tn * out_item    # patches + out (2 bufs)
    tm_cap = max(8, min(1024, ((budget - fixed) // max(per_row, 1)) // 8 * 8))
    tm_cap = min(tm_cap, M8)

    tm = None
    for cand in range(tm_cap, 7, -8):
        if M8 % cand == 0:
            if 2 * cand >= min(tm_cap, 512):          # reject tiny divisors
                tm = cand
            break
    if tm is None:
        # No good divisor: balanced tiles with minimal row padding.
        n_steps = -(-M8 // tm_cap)
        tm = _round_up(-(-M8 // n_steps), 8)

    # v7x megacore: avoid a single-step grid when the M axis splits cleanly.
    grid_m = -(-M8 // tm)
    if grid_m * (EP // tn) < 2 and M8 >= 16 and M8 % 16 == 0:
        tm = M8 // 2
    return tm, tn


def anisotropic_patch_embedding(x, weight, bias, kernel_size, stride=None, *,
                                operand_dtype=None):
    """Forward of AnisotropicPatchEmbedding.

    x: (B, C, H, W); weight: (E, C, kh, kw); bias: (E,)  ->  (B, T, E).
    operand_dtype: optional narrower matmul-operand dtype (e.g. jnp.bfloat16);
      accumulation stays f32.  Default None matches PyTorch f32 numerics.
    """
    if stride is None:
        stride = kernel_size
    B, C, H, W = x.shape
    E = weight.shape[0]

    patches, T, K = _extract_patches(x, kernel_size, stride)       # (M, K)
    M = B * T

    # Lane/sublane-friendly padding: K to a multiple of 8, E to 128.
    K8 = _round_up(K, 8)
    EP = _round_up(E, 128)

    w2 = weight.reshape(E, K).T                                    # (K, E)
    if K8 != K:
        patches = jnp.pad(patches, ((0, 0), (0, K8 - K)))
        w2 = jnp.pad(w2, ((0, K8 - K), (0, 0)))
    if EP != E:
        w2 = jnp.pad(w2, ((0, 0), (0, EP - E)))
        b2 = jnp.pad(bias, (0, EP - E)).reshape(1, EP)
    else:
        b2 = bias.reshape(1, EP)
    b2 = b2.astype(jnp.float32)

    if operand_dtype is not None:
        patches = patches.astype(operand_dtype)
        w2 = w2.astype(operand_dtype)

    in_item = jnp.dtype(patches.dtype).itemsize
    out_item = jnp.dtype(x.dtype).itemsize
    budget = _vmem_budget_bytes()
    tm, tn = _pick_tiles(M, K8, EP, in_item, out_item, budget)

    Mp = _round_up(M, tm)
    if Mp != M:
        patches = jnp.pad(patches, ((0, Mp - M), (0, 0)))

    grid = (Mp // tm, EP // tn)

    cost = pl.CostEstimate(
        flops=2 * Mp * K8 * EP,
        transcendentals=0,
        bytes_accessed=in_item * (Mp * K8 + K8 * EP) + out_item * Mp * EP + 4 * EP,
    )

    def _run(single_buffer_params):
        extra = {"pipeline_mode": pl.Buffered(1)} if single_buffer_params else {}
        in_specs = [
            # Patch block: default double-buffering; block index is constant
            # over j, so it stays VMEM-resident across the inner EP sweep.
            pl.BlockSpec((tm, K8), lambda i, j: (i, 0)),
            # Weight / bias: constant over i -> single buffer is enough.
            pl.BlockSpec((K8, tn), lambda i, j: (0, j), **extra),
            pl.BlockSpec((1, tn), lambda i, j: (0, j), **extra),
        ]
        return pl.pallas_call(
            _patch_embed_kernel,
            out_shape=jax.ShapeDtypeStruct((Mp, EP), x.dtype),
            grid_spec=pl.GridSpec(
                grid=grid,
                in_specs=in_specs,
                out_specs=pl.BlockSpec((tm, tn), lambda i, j: (i, j)),
            ),
            compiler_params=pltpu.CompilerParams(
                dimension_semantics=("parallel", "parallel"),
                vmem_limit_bytes=budget,
                # Let XLA fuse the im2col reshape/transpose/gather into the
                # pallas input stream instead of materializing (B*T, K) in HBM.
                allow_input_fusion=[True, False, False],
            ),
            cost_estimate=cost,
        )(patches, w2, b2)

    try:
        out = _run(True)
    except Exception:   # older jax without BlockSpec pipeline_mode support
        out = _run(False)

    # norm_layer=None -> nn.Identity(); un-pad only when actually padded.
    if Mp != M or EP != E:
        out = out[:M, :E]
    return out.reshape(B, T, E)


def _reference(x, weight, bias, stride):
    ref = jax.lax.conv_general_dilated(
        x, weight, window_strides=stride, padding="VALID",
        dimension_numbers=("NCHW", "OIHW", "NCHW"))
    ref = ref + bias[None, :, None, None]
    E = weight.shape[0]
    return ref.reshape(x.shape[0], E, -1).transpose(0, 2, 1)


if __name__ == "__main__":
    B, C = 2, 4
    hw_shape = (16, 16)
    kernel_size = (8, 4)
    embed_dim = 32

    key = jax.random.PRNGKey(0)
    kx, kw_, kb = jax.random.split(key, 3)
    x = jax.random.normal(kx, (B, C, *hw_shape), dtype=jnp.float32)
    fan_in = C * kernel_size[0] * kernel_size[1]
    weight = jax.random.normal(
        kw_, (embed_dim, C, *kernel_size), dtype=jnp.float32) / jnp.sqrt(fan_in)
    bias = jax.random.normal(kb, (embed_dim,), dtype=jnp.float32) * 0.01

    # Case 1: stride == kernel_size (module default) -> reshape/transpose path.
    stride1 = kernel_size
    out1 = jax.block_until_ready(
        anisotropic_patch_embedding(x, weight, bias, kernel_size, stride1))
    ref1 = _reference(x, weight, bias, stride1)
    assert out1.shape == ref1.shape, (out1.shape, ref1.shape)
    assert jnp.allclose(out1, ref1, atol=1e-4, rtol=1e-4)

    # Case 2: overlapping stride -> gather path.
    stride2 = (4, 4)
    out2 = jax.block_until_ready(
        anisotropic_patch_embedding(x, weight, bias, kernel_size, stride2))
    ref2 = _reference(x, weight, bias, stride2)
    assert out2.shape == ref2.shape, (out2.shape, ref2.shape)
    assert jnp.allclose(out2, ref2, atol=1e-4, rtol=1e-4)

    # Case 3: opt-in bf16 operand path (f32 accumulation) — loose tolerance.
    out3 = jax.block_until_ready(
        anisotropic_patch_embedding(x, weight, bias, kernel_size, stride1,
                                    operand_dtype=jnp.bfloat16))
    assert out3.shape == ref1.shape
    assert jnp.allclose(out3, ref1, atol=8e-2, rtol=5e-2)

    print("KERNEL_OK")
</pallas_src>

<mosaic_0001>
module attributes {stable_mosaic.version = 11 : i64} {
  func.func @_patch_embed_kernel(%arg0: i32, %arg1: i32, %arg2: memref<8x128xf32, #tpu.memory_space<vmem>>, %arg3: memref<128x128xf32, #tpu.memory_space<vmem>>, %arg4: memref<1x128xf32, #tpu.memory_space<vmem>>, %arg5: memref<8x128xf32, #tpu.memory_space<vmem>>) attributes {dimension_semantics = [#tpu.dimension_semantics<parallel>, #tpu.dimension_semantics<parallel>], iteration_bounds = array<i64: 2, 1>, scalar_prefetch = 0 : i64, scratch_operands = 0 : i64, tpu.core_type = #tpu.core_type<tc>, window_params = [{transform_indices = @transform_0, window_bounds = array<i64: 8, 128>}, {pipeline_mode = #tpu.pipeline_mode<synchronous>, transform_indices = @transform_1, window_bounds = array<i64: 128, 128>}, {pipeline_mode = #tpu.pipeline_mode<synchronous>, transform_indices = @transform_2, window_bounds = array<i64: 1, 128>}, {transform_indices = @transform_3, window_bounds = array<i64: 8, 128>}]} {
    %c0 = arith.constant 0 : index
    %c0_0 = arith.constant 0 : index
    %0 = vector.load %arg2[%c0, %c0_0] : memref<8x128xf32, #tpu.memory_space<vmem>>, vector<8x128xf32>
    %c0_1 = arith.constant 0 : index
    %c0_2 = arith.constant 0 : index
    %1 = vector.load %arg3[%c0_1, %c0_2] : memref<128x128xf32, #tpu.memory_space<vmem>>, vector<128x128xf32>
    %cst = arith.constant dense<0.000000e+00> : vector<8x128xf32>
    %2 = tpu.matmul %0, %1, %cst {dimension_numbers = #tpu.dot_dimension_numbers<[1], [0], [0], [1], [0, 0, 1, 1], [], []>} : vector<8x128xf32>, vector<128x128xf32>, vector<8x128xf32> -> vector<8x128xf32>
    %c0_3 = arith.constant 0 : index
    %c0_4 = arith.constant 0 : index
    %3 = vector.load %arg4[%c0_3, %c0_4] : memref<1x128xf32, #tpu.memory_space<vmem>>, vector<1x128xf32>
    %4 = vector.broadcast %3 : vector<1x128xf32> to vector<8x128xf32>
    %5 = arith.addf %2, %4 : vector<8x128xf32>
    %c0_5 = arith.constant 0 : index
    %c0_6 = arith.constant 0 : index
    %6 = vector.load %arg5[%c0_5, %c0_6] : memref<8x128xf32, #tpu.memory_space<vmem>>, vector<8x128xf32>
    tpu.vector_store %arg5[%c0_5, %c0_6], %5 {strides = array<i32>} : memref<8x128xf32, #tpu.memory_space<vmem>>, vector<8x128xf32>,
    return
  }
  func.func @transform_0(%arg0: i32, %arg1: i32) -> (i32, i32) {
    %c0_i32 = arith.constant 0 : i32
    %c0_i32_0 = arith.constant 0 : i32
    return %arg0, %c0_i32 : i32, i32
  }
  func.func @transform_1(%arg0: i32, %arg1: i32) -> (i32, i32) {
    %c0_i32 = arith.constant 0 : i32
    %c0_i32_0 = arith.constant 0 : i32
    return %c0_i32, %arg1 : i32, i32
  }
  func.func @transform_2(%arg0: i32, %arg1: i32) -> (i32, i32) {
    %c0_i32 = arith.constant 0 : i32
    %c0_i32_0 = arith.constant 0 : i32
    return %c0_i32, %arg1 : i32, i32
  }
  func.func @transform_3(%arg0: i32, %arg1: i32) -> (i32, i32) {
    %c0_i32 = arith.constant 0 : i32
    return %arg0, %arg1 : i32, i32
  }
}

module attributes {stable_mosaic.version = 11 : i64} {
  func.func @_patch_embed_kernel(%arg0: i32, %arg1: i32, %arg2: memref<8x128xf32, #tpu.memory_space<vmem>>, %arg3: memref<128x128xf32, #tpu.memory_space<vmem>>, %arg4: memref<1x128xf32, #tpu.memory_space<vmem>>, %arg5: memref<8x128xf32, #tpu.memory_space<vmem>>) attributes {dimension_semantics = [#tpu.dimension_semantics<parallel>, #tpu.dimension_semantics<parallel>], iteration_bounds = array<i64: 2, 1>, scalar_prefetch = 0 : i64, scratch_operands = 0 : i64, tpu.core_type = #tpu.core_type<tc>, window_params = [{transform_indices = @transform_0, window_bounds = array<i64: 8, 128>}, {transform_indices = @transform_1, window_bounds = array<i64: 128, 128>}, {transform_indices = @transform_2, window_bounds = array<i64: 1, 128>}, {transform_indices = @transform_3, window_bounds = array<i64: 8, 128>}]} {
    %c0 = arith.constant 0 : index
    %c0_0 = arith.constant 0 : index
    %0 = vector.load %arg2[%c0, %c0_0] : memref<8x128xf32, #tpu.memory_space<vmem>>, vector<8x128xf32>
    %c0_1 = arith.constant 0 : index
    %c0_2 = arith.constant 0 : index
    %1 = vector.load %arg3[%c0_1, %c0_2] : memref<128x128xf32, #tpu.memory_space<vmem>>, vector<128x128xf32>
    %cst = arith.constant dense<0.000000e+00> : vector<8x128xf32>
    %2 = tpu.matmul %0, %1, %cst {dimension_numbers = #tpu.dot_dimension_numbers<[1], [0], [0], [1], [0, 0, 1, 1], [], []>} : vector<8x128xf32>, vector<128x128xf32>, vector<8x128xf32> -> vector<8x128xf32>
    %c0_3 = arith.constant 0 : index
    %c0_4 = arith.constant 0 : index
    %3 = vector.load %arg4[%c0_3, %c0_4] : memref<1x128xf32, #tpu.memory_space<vmem>>, vector<1x128xf32>
    %4 = vector.broadcast %3 : vector<1x128xf32> to vector<8x128xf32>
    %5 = arith.addf %2, %4 : vector<8x128xf32>
    %c0_5 = arith.constant 0 : index
    %c0_6 = arith.constant 0 : index
    %6 = vector.load %arg5[%c0_5, %c0_6] : memref<8x128xf32, #tpu.memory_space<vmem>>, vector<8x128xf32>
    tpu.vector_store %arg5[%c0_5, %c0_6], %5 {strides = array<i32>} : memref<8x128xf32, #tpu.memory_space<vmem>>, vector<8x128xf32>,
    return
  }
  func.func @transform_0(%arg0: i32, %arg1: i32) -> (i32, i32) {
    %c0_i32 = arith.constant 0 : i32
    %c0_i32_0 = arith.constant 0 : i32
    return %arg0, %c0_i32 : i32, i32
  }
  func.func @transform_1(%arg0: i32, %arg1: i32) -> (i32, i32) {
    %c0_i32 = arith.constant 0 : i32
    %c0_i32_0 = arith.constant 0 : i32
    return %c0_i32, %arg1 : i32, i32
  }
  func.func @transform_2(%arg0: i32, %arg1: i32) -> (i32, i32) {
    %c0_i32 = arith.constant 0 : i32
    %c0_i32_0 = arith.constant 0 : i32
    return %c0_i32, %arg1 : i32, i32
  }
  func.func @transform_3(%arg0: i32, %arg1: i32) -> (i32, i32) {
    %c0_i32 = arith.constant 0 : i32
    return %arg0, %arg1 : i32, i32
  }
}

</mosaic_0001>

<llo_original>
// kernel: tpu_custom_call.1
$region0: #{tpu_custom_call.1}
  #allocation0 [shape = 'u32[]', space=smem, size = 0x4, offset = 0x4, fixed_abs, tag = 'smem constant byte address 0x4 - core index']
  #allocation1 [shape = 'u32[144,128]{1,0:T(1,128)}', space=vmem, size = 0x12000, scoped, tag = 'internal scratch']
  %s0 = inlined_call_operand.hbm [shape: f32[16,128], index: 0, kind: input, shape index: {}]
  %s1 = inlined_call_operand.hbm [shape: f32[128,128], index: 1, kind: input, shape index: {}]
  %s2 = inlined_call_operand.vmem [shape: f32[1,128], index: 2, kind: input, shape index: {}]
  %s3 = inlined_call_operand.hbm [shape: f32[16,128], index: 3, kind: output, shape index: {}]
  %s4 = sld [smem:[#allocation0]]
  $region53: #{tpu_custom_call.1} parent=0
    _
  %s6 = ssub.s32 1, %s4
  %s7 = scalar_select 0, %s6, %s4
  $region1: #{tpu_custom_call.1} parent=0
    #allocation2 [shape = 'u8[8192]{0}', space=vmem, size = 0x2000, scoped, tag = 'input window, operand 0']
    #allocation3 [shape = 's32[2]{0}', space=sflag, size = 0x8, scoped, tag = 'scoped memory for tpu_custom_call.1']
    #allocation4 [shape = 's32[2]{0}', space=sflag, size = 0x8, scoped, tag = 'scoped memory for tpu_custom_call.1']
    #allocation5 [shape = 'u8[65536]{0}', space=vmem, size = 0x10000, scoped, tag = 'input window, operand 1, single buffered']
    #allocation6 [shape = 's32[1]{0}', space=sflag, size = 0x4, scoped, tag = 'scoped memory for tpu_custom_call.1']
    #allocation7 [shape = 'u8[8192]{0}', space=vmem, size = 0x2000, scoped, tag = 'output window, operand 0']
    %8 = vsyncpa [#allocation3], 0
    %s9 = scalar_lea.sflag [#allocation3], 1
    %10 = vsyncpa %s9, 0
    %11 = vsyncpa [#allocation6], 0
    %12 = vsyncpa [#allocation4], 0
    %s13 = scalar_lea.sflag [#allocation4], 1
    %14 = vsyncpa %s13, 0
    loop: start=0, step=1, limit=4
    $region2: #{tpu_custom_call.1} parent=1 // loop_pre_header
      _
    $region3: #{tpu_custom_call.1} parent=1 // loop_header
      %s16 = sphi 0, %s20
      %p17 = scmp.ge.s32.totalorder %s16, 4
      %s23 = sphi 0, %s35
      %s24 = sphi 0, %s31
      %s25 = sphi 0, %s23
      %s26 = sphi 0, %s24
      %s27 = sphi 0, %s25
      %s28 = sphi 0, %s26
      %s38 = sphi 0, %s40
      %s41 = sphi 0, %s38
      %s42 = sphi 0, %s41
      %s58 = sphi 0, %s42
      %s64 = sphi 0, %s66
      %s67 = sphi 0, %s64
      %s68 = sphi 0, %s67
      %s84 = sphi 0, %s68
      %s90 = sphi 0, %s92
      %s93 = sphi 0, %s90
      %s94 = sphi 0, %s93
      %s110 = sphi 0, %s94
      %s118 = sphi 0, %s120
      %s121 = sphi 0, %s118
      %s122 = sphi 0, %s121
      %s138 = sphi 0, %s122
    $region4: #{tpu_custom_call.1} parent=1 // loop_header_branch
      %19 = sbr.rel (%p17) target = $region8
    $region5: #{tpu_custom_call.1} parent=1 // loop_body
      %s21 = ssub.s32 %s16, 1
      %s22 = ssub.s32 %s16, 2
      %s29 = sadd.s32 1, %s24
      %p30 = scmp.ge.s32.totalorder %s29, 1
      %s31 = scalar_select %p30, 0, %s29
      %s32 = sadd.s32 1, %s23
      %s33 = scalar_select %p30, %s32, %s23
      %p34 = scmp.ge.s32.totalorder %s33, 2
      %s35 = scalar_select %p34, 0, %s33
      %s36 = ssub.s32 %s23, %s35
      %p37 = scmp.eq.s32.totalorder %s36, 0
      %s39 = sadd.s32 %s38, 1
      %s40 = scalar_select %p37, %s38, %s39
      %p43 = pneg %p37
      %p44 = scmp.eq.s32.totalorder %s16, 1
      %p45 = por %p43, %p44
      %p46 = scmp.ne.s32.totalorder %s38, %s41
      %p47 = scmp.eq.s32.totalorder %s16, 0
      %p48 = por %p46, %p47
      %p49 = scmp.ne.s32.totalorder %s38, %s41
      %p50 = scmp.eq.s32.totalorder %s21, 1
      %p51 = por %p49, %p50
      %p52 = scmp.ne.s32.totalorder %s41, %s42
      %p53 = scmp.eq.s32.totalorder %s21, 0
      %p54 = por %p52, %p53
      %p55 = scmp.ne.s32.totalorder %s41, %s42
      %p56 = scmp.eq.s32.totalorder %s22, 1
      %p57 = por %p55, %p56
      %p59 = scmp.ne.s32.totalorder %s42, %s58
      %p60 = scmp.eq.s32.totalorder %s22, 0
      %p61 = por %p59, %p60
      %s62 = ssub.s32 %s24, %s31
      %p63 = scmp.eq.s32.totalorder %s62, 0
      %s65 = sadd.s32 %s64, 1
      %s66 = scalar_select %p63, %s64, %s65
      %p69 = pneg %p63
      %p70 = scmp.eq.s32.totalorder %s16, 1
      %p71 = por %p69, %p70
      %p72 = scmp.ne.s32.totalorder %s64, %s67
      %p73 = scmp.eq.s32.totalorder %s16, 0
      %p74 = por %p72, %p73
      %p75 = scmp.ne.s32.totalorder %s64, %s67
      %p76 = scmp.eq.s32.totalorder %s21, 1
      %p77 = por %p75, %p76
      %p78 = scmp.ne.s32.totalorder %s67, %s68
      %p79 = scmp.eq.s32.totalorder %s21, 0
      %p80 = por %p78, %p79
      %p81 = scmp.ne.s32.totalorder %s67, %s68
      %p82 = scmp.eq.s32.totalorder %s22, 1
      %p83 = por %p81, %p82
      %p85 = scmp.ne.s32.totalorder %s68, %s84
      %p86 = scmp.eq.s32.totalorder %s22, 0
      %p87 = por %p85, %p86
      %s88 = ssub.s32 %s24, %s31
      %p89 = scmp.eq.s32.totalorder %s88, 0
      %s91 = sadd.s32 %s90, 1
      %s92 = scalar_select %p89, %s90, %s91
      %p95 = pneg %p89
      %p96 = scmp.eq.s32.totalorder %s16, 1
      %p97 = por %p95, %p96
      %p98 = scmp.ne.s32.totalorder %s90, %s93
      %p99 = scmp.eq.s32.totalorder %s16, 0
      %p100 = por %p98, %p99
      %p101 = scmp.ne.s32.totalorder %s90, %s93
      %p102 = scmp.eq.s32.totalorder %s21, 1
      %p103 = por %p101, %p102
      %p104 = scmp.ne.s32.totalorder %s93, %s94
      %p105 = scmp.eq.s32.totalorder %s21, 0
      %p106 = por %p104, %p105
      %p107 = scmp.ne.s32.totalorder %s93, %s94
      %p108 = scmp.eq.s32.totalorder %s22, 1
      %p109 = por %p107, %p108
      %p111 = scmp.ne.s32.totalorder %s94, %s110
      %p112 = scmp.eq.s32.totalorder %s22, 0
      %p113 = por %p111, %p112
      %s114 = ssub.s32 %s23, %s35
      %s115 = ssub.s32 %s24, %s31
      %s116 = sor.u32 %s114, %s115
      %p117 = scmp.eq.s32.totalorder %s116, 0
      %s119 = sadd.s32 %s118, 1
      %s120 = scalar_select %p117, %s118, %s119
      %p123 = pneg %p117
      %p124 = scmp.eq.s32.totalorder %s16, 1
      %p125 = por %p123, %p124
      %p126 = scmp.ne.s32.totalorder %s118, %s121
      %p127 = scmp.eq.s32.totalorder %s16, 0
      %p128 = por %p126, %p127
      %p129 = scmp.ne.s32.totalorder %s118, %s121
      %p130 = scmp.eq.s32.totalorder %s21, 1
      %p131 = por %p129, %p130
      %p132 = scmp.ne.s32.totalorder %s121, %s122
      %p133 = scmp.eq.s32.totalorder %s21, 0
      %p134 = por %p132, %p133
      %p135 = scmp.ne.s32.totalorder %s121, %s122
      %p136 = scmp.eq.s32.totalorder %s22, 1
      %p137 = por %p135, %p136
      %p139 = scmp.ne.s32.totalorder %s122, %s138
      %p140 = scmp.eq.s32.totalorder %s22, 0
      %p141 = por %p139, %p140
      %p142 = scmp.le.s32.totalorder 1, %s16
      %p143 = scmp.lt.s32.totalorder %s16, 3
      %p144 = pnand %p142, %p143
      %p145 = pneg %p144
      // Predicated region
      $region9: #{tpu_custom_call.1} parent=5 // pred_check
        _
      $region10: #{tpu_custom_call.1} parent=5 // pred_check_branch
        %147 = sbr.rel (%p144) target = $region12
      $region11: #{tpu_custom_call.1} parent=5 // pred_region
        %s148 = ssub.s32 %s16, 1
        // Predicated region
        $region13: #{tpu_custom_call.1} parent=11 // pred_check
          %p149 = pneg %p80
        $region14: #{tpu_custom_call.1} parent=11 // pred_check_branch
          %151 = sbr.rel (%p149) target = $region16
        $region15: #{tpu_custom_call.1} parent=11 // pred_region
          %s153 = ssub.s32 2048, 2048
          %154 = vsyncadd [#allocation6], %s153
          %s155 = smul.addr %s26, 128
          %s156 = scalar_lea.hbm %s1, %s155
          %s157 = sshll.u32 [#allocation5], 4
          %s158 = int_to_ptr.vmem [resolvable:$true] %s157
          %163 = dma.hbm_to_vmem [thread:$0]  %s156, 2048, %s158, [#allocation6], 128, 128, 8
        $region16: #{tpu_custom_call.1} parent=11 // pred_fallthru
          _
        // Predicated region
        $region17: #{tpu_custom_call.1} parent=11 // pred_check
          %p164 = pneg %p106
        $region18: #{tpu_custom_call.1} parent=11 // pred_check_branch
          %166 = sbr.rel (%p164) target = $region20
        $region19: #{tpu_custom_call.1} parent=11 // pred_region
          %p167 = scmp.lt.s32.totalorder %s26, 0
          %s168 = scalar_select %p167, %s26, 0
          %s169 = scalar_lea.vmem %s2, %s168
        $region20: #{tpu_custom_call.1} parent=11 // pred_fallthru
          _
      $region12: #{tpu_custom_call.1} parent=5 // pred_fallthru
        _
      %p170 = scmp.lt.s32.totalorder %s16, 2
      // Predicated region
      $region21: #{tpu_custom_call.1} parent=5 // pred_check
        %p171 = pneg %p170
      $region22: #{tpu_custom_call.1} parent=5 // pred_check_branch
        %173 = sbr.rel (%p171) target = $region24
      $region23: #{tpu_custom_call.1} parent=5 // pred_region
        // Predicated region
        $region25: #{tpu_custom_call.1} parent=23 // pred_check
          %p174 = pneg %p48
        $region26: #{tpu_custom_call.1} parent=23 // pred_check_branch
          %176 = sbr.rel (%p174) target = $region28
        $region27: #{tpu_custom_call.1} parent=23 // pred_region
          %s177 = sand.u32 %s38, 1
          %s178 = scalar_lea.sflag [#allocation3], %s177
          %s179 = sand.u32 %s38, 1
          %s180 = smul.addr %s179, 8
          %s181 = scalar_lea.vmem [#allocation2], %s180
          %s183 = ssub.s32 128, 128
          %184 = vsyncadd %s178, %s183
          %s185 = smul.addr %s23, 128
          %s186 = scalar_lea.hbm %s0, %s185
          %s188 = sshll.u32 %s181, 4
          %s189 = int_to_ptr.vmem [resolvable:$true] %s188
          %191 = dma.hbm_to_vmem [thread:$0]  %s186, 128, %s189, %s178
        $region28: #{tpu_custom_call.1} parent=23 // pred_fallthru
          _
      $region24: #{tpu_custom_call.1} parent=5 // pred_fallthru
        _
      %p192 = scmp.le.s32.totalorder 1, %s16
      %p193 = scmp.lt.s32.totalorder %s16, 3
      %p194 = pnand %p192, %p193
      %p195 = pneg %p194
      // Predicated region
      $region29: #{tpu_custom_call.1} parent=5 // pred_check
        _
      $region30: #{tpu_custom_call.1} parent=5 // pred_check_branch
        %197 = sbr.rel (%p194) target = $region32
      $region31: #{tpu_custom_call.1} parent=5 // pred_region
        %s198 = ssub.s32 %s16, 1
        %s199 = sand.u32 %s41, 1
        %s200 = scalar_lea.sflag [#allocation3], %s199
        %s201 = sand.u32 %s41, 1
        %s202 = smul.addr %s201, 8
        %s203 = scalar_lea.vmem [#allocation2], %s202
        // Predicated region
        $region33: #{tpu_custom_call.1} parent=31 // pred_check
          %p204 = pneg %p54
        $region34: #{tpu_custom_call.1} parent=31 // pred_check_branch
          %206 = sbr.rel (%p204) target = $region36
        $region35: #{tpu_custom_call.1} parent=31 // pred_region
          %207 = dma.done %s200, 128
        $region36: #{tpu_custom_call.1} parent=31 // pred_fallthru
          _
        // Predicated region
        $region37: #{tpu_custom_call.1} parent=31 // pred_check
          %p208 = pneg %p80
        $region38: #{tpu_custom_call.1} parent=31 // pred_check_branch
          %210 = sbr.rel (%p208) target = $region40
        $region39: #{tpu_custom_call.1} parent=31 // pred_region
          %211 = dma.done [#allocation6], 2048
        $region40: #{tpu_custom_call.1} parent=31 // pred_fallthru
          _
        %s212 = sand.u32 %s41, 1
        %s213 = scalar_lea.sflag [#allocation3], %s212
        %s214 = sand.u32 %s41, 1
        %s215 = smul.addr %s214, 8
        %s216 = scalar_lea.vmem [#allocation2], %s215
        %p217 = pneg %p54
        %p218 = pneg %p51
        %p219 = pneg %p80
        %p220 = pneg %p77
        %p221 = scmp.lt.s32.totalorder %s26, 0
        %s222 = scalar_select %p221, %s26, 0
        %s223 = scalar_lea.vmem %s2, %s222
        %p224 = pneg %p106
        %p225 = pneg %p103
        %p226 = pneg %p134
        %p227 = pneg %p131
        %s228 = sand.u32 %s121, 1
        %s229 = scalar_lea.sflag [#allocation4], %s228
        %s230 = sand.u32 %s121, 1
        %s231 = smul.addr %s230, 8
        %s232 = scalar_lea.vmem [#allocation7], %s231
        %p233 = scmp.lt.s32.totalorder %s26, 0
        %s234 = scalar_select %p233, %s26, 0
        %s235 = scalar_lea.vmem %s2, %s234
        %v236 = vld [vmem:[%s203] sm:$0xff]
        %v237 = vld [vmem:[#allocation5] sm:$0xff]
        %v238 = vld [vmem:[#allocation5 + $0x8] sm:$0xff]
        %v239 = vld [vmem:[#allocation5 + $0x10] sm:$0xff]
        %v240 = vld [vmem:[#allocation5 + $0x18] sm:$0xff]
        %v241 = vld [vmem:[#allocation5 + $0x20] sm:$0xff]
        %v242 = vld [vmem:[#allocation5 + $0x28] sm:$0xff]
        %v243 = vld [vmem:[#allocation5 + $0x30] sm:$0xff]
        %v244 = vld [vmem:[#allocation5 + $0x38] sm:$0xff]
        %v245 = vld [vmem:[#allocation5 + $0x40] sm:$0xff]
        %v246 = vld [vmem:[#allocation5 + $0x48] sm:$0xff]
        %v247 = vld [vmem:[#allocation5 + $0x50] sm:$0xff]
        %v248 = vld [vmem:[#allocation5 + $0x58] sm:$0xff]
        %v249 = vld [vmem:[#allocation5 + $0x60] sm:$0xff]
        %v250 = vld [vmem:[#allocation5 + $0x68] sm:$0xff]
        %v251 = vld [vmem:[#allocation5 + $0x70] sm:$0xff]
        %v252 = vld [vmem:[#allocation5 + $0x78] sm:$0xff]
        %v253 = vld [vmem:[%s235] sm:$0x1]
        %v255 = vlaneseq
        %v256 = vshrl.u32 %v255, 7
        %v257 = vsub.s32 0, %v256
        %v258 = vrot.slane %v253, %v257
        %260 = vmatprep.subr.mxu0 0.0
        %261 = vmatpush1.msra.mxu0 %v237
        %262 = vmatprep.subr.mxu0 0.0
        %263 = vmatpush1.msra.mxu0 %v238
        %264 = vmatprep.subr.mxu0 0.0
        %265 = vmatpush1.msra.mxu0 %v239
        %266 = vmatprep.subr.mxu0 0.0
        %267 = vmatpush1.msra.mxu0 %v240
        %268 = vmatprep.subr.mxu0 0.0
        %269 = vmatpush1.msra.mxu0 %v241
        %270 = vmatprep.subr.mxu0 0.0
        %271 = vmatpush1.msra.mxu0 %v242
        %272 = vmatprep.subr.mxu0 0.0
        %273 = vmatpush1.msra.mxu0 %v243
        %274 = vmatprep.subr.mxu0 0.0
        %275 = vmatpush1.msra.mxu0 %v244
        %276 = vmatprep.subr.mxu0 0.0
        %277 = vmatpush1.msra.mxu0 %v245
        %278 = vmatprep.subr.mxu0 0.0
        %279 = vmatpush1.msra.mxu0 %v246
        %280 = vmatprep.subr.mxu0 0.0
        %281 = vmatpush1.msra.mxu0 %v247
        %282 = vmatprep.subr.mxu0 0.0
        %283 = vmatpush1.msra.mxu0 %v248
        %284 = vmatprep.subr.mxu0 0.0
        %285 = vmatpush1.msra.mxu0 %v249
        %286 = vmatprep.subr.mxu0 0.0
        %287 = vmatpush1.msra.mxu0 %v250
        %288 = vmatprep.subr.mxu0 0.0
        %289 = vmatpush1.msra.mxu0 %v251
        %290 = vmatprep.subr.mxu0 0.0
        %291 = vmatpush1.msra.mxu0 %v252
        %292 = vmatprep.subr.mxu0 0.0
        %293 = vmatpush1.msra.mxu0 0.0
        %294 = vmatprep.subr.mxu0 0.0
        %295 = vmatpush1.msra.mxu0 0.0
        %296 = vmatprep.subr.mxu0 0.0
        %297 = vmatpush1.msra.mxu0 0.0
        %298 = vmatprep.subr.mxu0 0.0
        %299 = vmatpush1.msra.mxu0 0.0
        %300 = vmatprep.subr.mxu0 0.0
        %301 = vmatpush1.msra.mxu0 0.0
        %302 = vmatprep.subr.mxu0 0.0
        %303 = vmatpush1.msra.mxu0 0.0
        %304 = vmatprep.subr.mxu0 0.0
        %305 = vmatpush1.msra.mxu0 0.0
        %306 = vmatprep.subr.mxu0 0.0
        %307 = vmatpush1.msra.mxu0 0.0
        %308 = vmatprep.subr.mxu0 0.0
        %309 = vmatpush1.msra.mxu0 0.0
        %310 = vmatprep.subr.mxu0 0.0
        %311 = vmatpush1.msra.mxu0 0.0
        %312 = vmatprep.subr.mxu0 0.0
        %313 = vmatpush1.msra.mxu0 0.0
        %314 = vmatprep.subr.mxu0 0.0
        %315 = vmatpush1.msra.mxu0 0.0
        %316 = vmatprep.subr.mxu0 0.0
        %317 = vmatpush1.msra.mxu0 0.0
        %318 = vmatprep.subr.mxu0 0.0
        %319 = vmatpush1.msra.mxu0 0.0
        %320 = vmatprep.subr.mxu0 0.0
        %321 = vmatpush1.msra.mxu0 0.0
        %322 = vmatprep.subr.mxu0 0.0
        %323 = vmatpush1.msra.mxu0 0.0
        %324 = vmatprep.mubr.f32.mxu0 0.0
        %325 = vmatmul.mubr.f32.gmra.mrb[0].mxu0 %v236
        %v326 = vpop.f32.mrb[0].mxu0
        %v327 = vadd.f32 %v258, %v326
        %v328 = vpop.f32.mrb[0].mxu0
        %329 = vdwg.mxu0
        %330 = vst [vmem:[%s232] sm:$0xff] %v327
        %s331 = sand.u32 %s121, 1
        %s332 = scalar_lea.sflag [#allocation4], %s331
        %s333 = sand.u32 %s121, 1
        %s334 = smul.addr %s333, 8
        %s335 = scalar_lea.vmem [#allocation7], %s334
        // Predicated region
        $region41: #{tpu_custom_call.1} parent=31 // pred_check
          %p336 = pneg %p131
        $region42: #{tpu_custom_call.1} parent=31 // pred_check_branch
          %338 = sbr.rel (%p336) target = $region44
        $region43: #{tpu_custom_call.1} parent=31 // pred_region
          %s340 = ssub.s32 128, 128
          %341 = vsyncadd %s332, %s340
          %s342 = sadd.s32 %s26, %s25
          %s343 = smul.addr %s342, 128
          %s344 = scalar_lea.hbm %s3, %s343
          %s346 = sshll.u32 %s335, 4
          %s347 = int_to_ptr.vmem [resolvable:$true] %s346
          %349 = dma.vmem_to_hbm [thread:$0]  %s347, 128, %s344, %s332
        $region44: #{tpu_custom_call.1} parent=31 // pred_fallthru
          _
      $region32: #{tpu_custom_call.1} parent=5 // pred_fallthru
        _
      %p350 = scmp.le.s32.totalorder 2, %s16
      // Predicated region
      $region45: #{tpu_custom_call.1} parent=5 // pred_check
        %p351 = pneg %p350
      $region46: #{tpu_custom_call.1} parent=5 // pred_check_branch
        %353 = sbr.rel (%p351) target = $region48
      $region47: #{tpu_custom_call.1} parent=5 // pred_region
        %s354 = ssub.s32 %s16, 2
        // Predicated region
        $region49: #{tpu_custom_call.1} parent=47 // pred_check
          %p355 = pneg %p137
        $region50: #{tpu_custom_call.1} parent=47 // pred_check_branch
          %357 = sbr.rel (%p355) target = $region52
        $region51: #{tpu_custom_call.1} parent=47 // pred_region
          %s358 = sand.u32 %s122, 1
          %s359 = scalar_lea.sflag [#allocation4], %s358
          %s360 = sand.u32 %s122, 1
          %s361 = smul.addr %s360, 8
          %s362 = scalar_lea.vmem [#allocation7], %s361
          %363 = dma.done %s359, 128
        $region52: #{tpu_custom_call.1} parent=47 // pred_fallthru
          _
      $region48: #{tpu_custom_call.1} parent=5 // pred_fallthru
        _
    $region6: #{tpu_custom_call.1} parent=1 // loop_footer
      %s20 = sadd.s32 1, %s16
    $region7: #{tpu_custom_call.1} parent=1 // loop_footer_branch
      %15 = sbr.rel target = $region3
    $region8: #{tpu_custom_call.1} parent=1 // loop_exit
      _
    %364 = vsyncpa [#allocation3], 1
    %s365 = scalar_lea.sflag [#allocation3], 1
    %366 = vsyncpa %s365, 1
    %367 = vsyncpa [#allocation6], 1
    %368 = vsyncpa [#allocation4], 1
    %s369 = scalar_lea.sflag [#allocation4], 1
    %370 = vsyncpa %s369, 1

// kernel: tpu_custom_call.1
$region0: #{tpu_custom_call.1}
  #allocation0 [shape = 'u32[]', space=smem, size = 0x4, offset = 0x4, fixed_abs, tag = 'smem constant byte address 0x4 - core index']
  #allocation1 [shape = 'u32[144,128]{1,0:T(1,128)}', space=vmem, size = 0x12000, scoped, tag = 'internal scratch']
  %s0 = inlined_call_operand.hbm [shape: f32[16,128], index: 0, kind: input, shape index: {}]
  %s1 = inlined_call_operand.hbm [shape: f32[128,128], index: 1, kind: input, shape index: {}]
  %s2 = inlined_call_operand.vmem [shape: f32[1,128], index: 2, kind: input, shape index: {}]
  %s3 = inlined_call_operand.hbm [shape: f32[16,128], index: 3, kind: output, shape index: {}]
  %s4 = sld [smem:[#allocation0]]
  $region53: #{tpu_custom_call.1} parent=0
    _
  %s6 = ssub.s32 1, %s4
  %s7 = scalar_select 0, %s6, %s4
  $region1: #{tpu_custom_call.1} parent=0
    #allocation2 [shape = 'u8[8192]{0}', space=vmem, size = 0x2000, scoped, tag = 'input window, operand 0']
    #allocation3 [shape = 's32[2]{0}', space=sflag, size = 0x8, scoped, tag = 'scoped memory for tpu_custom_call.1']
    #allocation4 [shape = 's32[2]{0}', space=sflag, size = 0x8, scoped, tag = 'scoped memory for tpu_custom_call.1']
    #allocation5 [shape = 'u8[65536]{0}', space=vmem, size = 0x10000, scoped, tag = 'input window, operand 1, single buffered']
    #allocation6 [shape = 's32[1]{0}', space=sflag, size = 0x4, scoped, tag = 'scoped memory for tpu_custom_call.1']
    #allocation7 [shape = 'u8[8192]{0}', space=vmem, size = 0x2000, scoped, tag = 'output window, operand 0']
    %8 = vsyncpa [#allocation3], 0
    %s9 = scalar_lea.sflag [#allocation3], 1
    %10 = vsyncpa %s9, 0
    %11 = vsyncpa [#allocation6], 0
    %12 = vsyncpa [#allocation4], 0
    %s13 = scalar_lea.sflag [#allocation4], 1
    %14 = vsyncpa %s13, 0
    loop: start=0, step=1, limit=4
    $region2: #{tpu_custom_call.1} parent=1 // loop_pre_header
      _
    $region3: #{tpu_custom_call.1} parent=1 // loop_header
      %s16 = sphi 0, %s20
      %p17 = scmp.ge.s32.totalorder %s16, 4
      %s23 = sphi 0, %s35
      %s24 = sphi 0, %s31
      %s25 = sphi 0, %s23
      %s26 = sphi 0, %s24
      %s27 = sphi 0, %s25
      %s28 = sphi 0, %s26
      %s38 = sphi 0, %s40
      %s41 = sphi 0, %s38
      %s42 = sphi 0, %s41
      %s58 = sphi 0, %s42
      %s64 = sphi 0, %s66
      %s67 = sphi 0, %s64
      %s68 = sphi 0, %s67
      %s84 = sphi 0, %s68
      %s90 = sphi 0, %s92
      %s93 = sphi 0, %s90
      %s94 = sphi 0, %s93
      %s110 = sphi 0, %s94
      %s118 = sphi 0, %s120
      %s121 = sphi 0, %s118
      %s122 = sphi 0, %s121
      %s138 = sphi 0, %s122
    $region4: #{tpu_custom_call.1} parent=1 // loop_header_branch
      %19 = sbr.rel (%p17) target = $region8
    $region5: #{tpu_custom_call.1} parent=1 // loop_body
      %s21 = ssub.s32 %s16, 1
      %s22 = ssub.s32 %s16, 2
      %s29 = sadd.s32 1, %s24
      %p30 = scmp.ge.s32.totalorder %s29, 1
      %s31 = scalar_select %p30, 0, %s29
      %s32 = sadd.s32 1, %s23
      %s33 = scalar_select %p30, %s32, %s23
      %p34 = scmp.ge.s32.totalorder %s33, 2
      %s35 = scalar_select %p34, 0, %s33
      %s36 = ssub.s32 %s23, %s35
      %p37 = scmp.eq.s32.totalorder %s36, 0
      %s39 = sadd.s32 %s38, 1
      %s40 = scalar_select %p37, %s38, %s39
      %p43 = pneg %p37
      %p44 = scmp.eq.s32.totalorder %s16, 1
      %p45 = por %p43, %p44
      %p46 = scmp.ne.s32.totalorder %s38, %s41
      %p47 = scmp.eq.s32.totalorder %s16, 0
      %p48 = por %p46, %p47
      %p49 = scmp.ne.s32.totalorder %s38, %s41
      %p50 = scmp.eq.s32.totalorder %s21, 1
      %p51 = por %p49, %p50
      %p52 = scmp.ne.s32.totalorder %s41, %s42
      %p53 = scmp.eq.s32.totalorder %s21, 0
      %p54 = por %p52, %p53
      %p55 = scmp.ne.s32.totalorder %s41, %s42
      %p56 = scmp.eq.s32.totalorder %s22, 1
      %p57 = por %p55, %p56
      %p59 = scmp.ne.s32.totalorder %s42, %s58
      %p60 = scmp.eq.s32.totalorder %s22, 0
      %p61 = por %p59, %p60
      %s62 = ssub.s32 %s24, %s31
      %p63 = scmp.eq.s32.totalorder %s62, 0
      %s65 = sadd.s32 %s64, 1
      %s66 = scalar_select %p63, %s64, %s65
      %p69 = pneg %p63
      %p70 = scmp.eq.s32.totalorder %s16, 1
      %p71 = por %p69, %p70
      %p72 = scmp.ne.s32.totalorder %s64, %s67
      %p73 = scmp.eq.s32.totalorder %s16, 0
      %p74 = por %p72, %p73
      %p75 = scmp.ne.s32.totalorder %s64, %s67
      %p76 = scmp.eq.s32.totalorder %s21, 1
      %p77 = por %p75, %p76
      %p78 = scmp.ne.s32.totalorder %s67, %s68
      %p79 = scmp.eq.s32.totalorder %s21, 0
      %p80 = por %p78, %p79
      %p81 = scmp.ne.s32.totalorder %s67, %s68
      %p82 = scmp.eq.s32.totalorder %s22, 1
      %p83 = por %p81, %p82
      %p85 = scmp.ne.s32.totalorder %s68, %s84
      %p86 = scmp.eq.s32.totalorder %s22, 0
      %p87 = por %p85, %p86
      %s88 = ssub.s32 %s24, %s31
      %p89 = scmp.eq.s32.totalorder %s88, 0
      %s91 = sadd.s32 %s90, 1
      %s92 = scalar_select %p89, %s90, %s91
      %p95 = pneg %p89
      %p96 = scmp.eq.s32.totalorder %s16, 1
      %p97 = por %p95, %p96
      %p98 = scmp.ne.s32.totalorder %s90, %s93
      %p99 = scmp.eq.s32.totalorder %s16, 0
      %p100 = por %p98, %p99
      %p101 = scmp.ne.s32.totalorder %s90, %s93
      %p102 = scmp.eq.s32.totalorder %s21, 1
      %p103 = por %p101, %p102
      %p104 = scmp.ne.s32.totalorder %s93, %s94
      %p105 = scmp.eq.s32.totalorder %s21, 0
      %p106 = por %p104, %p105
      %p107 = scmp.ne.s32.totalorder %s93, %s94
      %p108 = scmp.eq.s32.totalorder %s22, 1
      %p109 = por %p107, %p108
      %p111 = scmp.ne.s32.totalorder %s94, %s110
      %p112 = scmp.eq.s32.totalorder %s22, 0
      %p113 = por %p111, %p112
      %s114 = ssub.s32 %s23, %s35
      %s115 = ssub.s32 %s24, %s31
      %s116 = sor.u32 %s114, %s115
      %p117 = scmp.eq.s32.totalorder %s116, 0
      %s119 = sadd.s32 %s118, 1
      %s120 = scalar_select %p117, %s118, %s119
      %p123 = pneg %p117
      %p124 = scmp.eq.s32.totalorder %s16, 1
      %p125 = por %p123, %p124
      %p126 = scmp.ne.s32.totalorder %s118, %s121
      %p127 = scmp.eq.s32.totalorder %s16, 0
      %p128 = por %p126, %p127
      %p129 = scmp.ne.s32.totalorder %s118, %s121
      %p130 = scmp.eq.s32.totalorder %s21, 1
      %p131 = por %p129, %p130
      %p132 = scmp.ne.s32.totalorder %s121, %s122
      %p133 = scmp.eq.s32.totalorder %s21, 0
      %p134 = por %p132, %p133
      %p135 = scmp.ne.s32.totalorder %s121, %s122
      %p136 = scmp.eq.s32.totalorder %s22, 1
      %p137 = por %p135, %p136
      %p139 = scmp.ne.s32.totalorder %s122, %s138
      %p140 = scmp.eq.s32.totalorder %s22, 0
      %p141 = por %p139, %p140
      %p142 = scmp.le.s32.totalorder 1, %s16
      %p143 = scmp.lt.s32.totalorder %s16, 3
      %p144 = pnand %p142, %p143
      %p145 = pneg %p144
      // Predicated region
      $region9: #{tpu_custom_call.1} parent=5 // pred_check
        _
      $region10: #{tpu_custom_call.1} parent=5 // pred_check_branch
        %147 = sbr.rel (%p144) target = $region12
      $region11: #{tpu_custom_call.1} parent=5 // pred_region
        %s148 = ssub.s32 %s16, 1
        // Predicated region
        $region13: #{tpu_custom_call.1} parent=11 // pred_check
          %p149 = pneg %p80
        $region14: #{tpu_custom_call.1} parent=11 // pred_check_branch
          %151 = sbr.rel (%p149) target = $region16
        $region15: #{tpu_custom_call.1} parent=11 // pred_region
          %s153 = ssub.s32 2048, 2048
          %154 = vsyncadd [#allocation6], %s153
          %s155 = smul.addr %s26, 128
          %s156 = scalar_lea.hbm %s1, %s155
          %s157 = sshll.u32 [#allocation5], 4
          %s158 = int_to_ptr.vmem [resolvable:$true] %s157
          %163 = dma.hbm_to_vmem [thread:$0]  %s156, 2048, %s158, [#allocation6], 128, 128, 8
        $region16: #{tpu_custom_call.1} parent=11 // pred_fallthru
          _
        // Predicated region
        $region17: #{tpu_custom_call.1} parent=11 // pred_check
          %p164 = pneg %p106
        $region18: #{tpu_custom_call.1} parent=11 // pred_check_branch
          %166 = sbr.rel (%p164) target = $region20
        $region19: #{tpu_custom_call.1} parent=11 // pred_region
          %p167 = scmp.lt.s32.totalorder %s26, 0
          %s168 = scalar_select %p167, %s26, 0
          %s169 = scalar_lea.vmem %s2, %s168
        $region20: #{tpu_custom_call.1} parent=11 // pred_fallthru
          _
      $region12: #{tpu_custom_call.1} parent=5 // pred_fallthru
        _
      %p170 = scmp.lt.s32.totalorder %s16, 2
      // Predicated region
      $region21: #{tpu_custom_call.1} parent=5 // pred_check
        %p171 = pneg %p170
      $region22: #{tpu_custom_call.1} parent=5 // pred_check_branch
        %173 = sbr.rel (%p171) target = $region24
      $region23: #{tpu_custom_call.1} parent=5 // pred_region
        // Predicated region
        $region25: #{tpu_custom_call.1} parent=23 // pred_check
          %p174 = pneg %p48
        $region26: #{tpu_custom_call.1} parent=23 // pred_check_branch
          %176 = sbr.rel (%p174) target = $region28
        $region27: #{tpu_custom_call.1} parent=23 // pred_region
          %s177 = sand.u32 %s38, 1
          %s178 = scalar_lea.sflag [#allocation3], %s177
          %s179 = sand.u32 %s38, 1
          %s180 = smul.addr %s179, 8
          %s181 = scalar_lea.vmem [#allocation2], %s180
          %s183 = ssub.s32 128, 128
          %184 = vsyncadd %s178, %s183
          %s185 = smul.addr %s23, 128
          %s186 = scalar_lea.hbm %s0, %s185
          %s188 = sshll.u32 %s181, 4
          %s189 = int_to_ptr.vmem [resolvable:$true] %s188
          %191 = dma.hbm_to_vmem [thread:$0]  %s186, 128, %s189, %s178
        $region28: #{tpu_custom_call.1} parent=23 // pred_fallthru
          _
      $region24: #{tpu_custom_call.1} parent=5 // pred_fallthru
        _
      %p192 = scmp.le.s32.totalorder 1, %s16
      %p193 = scmp.lt.s32.totalorder %s16, 3
      %p194 = pnand %p192, %p193
      %p195 = pneg %p194
      // Predicated region
      $region29: #{tpu_custom_call.1} parent=5 // pred_check
        _
      $region30: #{tpu_custom_call.1} parent=5 // pred_check_branch
        %197 = sbr.rel (%p194) target = $region32
      $region31: #{tpu_custom_call.1} parent=5 // pred_region
        %s198 = ssub.s32 %s16, 1
        %s199 = sand.u32 %s41, 1
        %s200 = scalar_lea.sflag [#allocation3], %s199
        %s201 = sand.u32 %s41, 1
        %s202 = smul.addr %s201, 8
        %s203 = scalar_lea.vmem [#allocation2], %s202
        // Predicated region
        $region33: #{tpu_custom_call.1} parent=31 // pred_check
          %p204 = pneg %p54
        $region34: #{tpu_custom_call.1} parent=31 // pred_check_branch
          %206 = sbr.rel (%p204) target = $region36
        $region35: #{tpu_custom_call.1} parent=31 // pred_region
          %207 = dma.done %s200, 128
        $region36: #{tpu_custom_call.1} parent=31 // pred_fallthru
          _
        // Predicated region
        $region37: #{tpu_custom_call.1} parent=31 // pred_check
          %p208 = pneg %p80
        $region38: #{tpu_custom_call.1} parent=31 // pred_check_branch
          %210 = sbr.rel (%p208) target = $region40
        $region39: #{tpu_custom_call.1} parent=31 // pred_region
          %211 = dma.done [#allocation6], 2048
        $region40: #{tpu_custom_call.1} parent=31 // pred_fallthru
          _
        %s212 = sand.u32 %s41, 1
        %s213 = scalar_lea.sflag [#allocation3], %s212
        %s214 = sand.u32 %s41, 1
        %s215 = smul.addr %s214, 8
        %s216 = scalar_lea.vmem [#allocation2], %s215
        %p217 = pneg %p54
        %p218 = pneg %p51
        %p219 = pneg %p80
        %p220 = pneg %p77
        %p221 = scmp.lt.s32.totalorder %s26, 0
        %s222 = scalar_select %p221, %s26, 0
        %s223 = scalar_lea.vmem %s2, %s222
        %p224 = pneg %p106
        %p225 = pneg %p103
        %p226 = pneg %p134
        %p227 = pneg %p131
        %s228 = sand.u32 %s121, 1
        %s229 = scalar_lea.sflag [#allocation4], %s228
        %s230 = sand.u32 %s121, 1
        %s231 = smul.addr %s230, 8
        %s232 = scalar_lea.vmem [#allocation7], %s231
        %p233 = scmp.lt.s32.totalorder %s26, 0
        %s234 = scalar_select %p233, %s26, 0
        %s235 = scalar_lea.vmem %s2, %s234
        %v236 = vld [vmem:[%s203] sm:$0xff]
        %v237 = vld [vmem:[#allocation5] sm:$0xff]
        %v238 = vld [vmem:[#allocation5 + $0x8] sm:$0xff]
        %v239 = vld [vmem:[#allocation5 + $0x10] sm:$0xff]
        %v240 = vld [vmem:[#allocation5 + $0x18] sm:$0xff]
        %v241 = vld [vmem:[#allocation5 + $0x20] sm:$0xff]
        %v242 = vld [vmem:[#allocation5 + $0x28] sm:$0xff]
        %v243 = vld [vmem:[#allocation5 + $0x30] sm:$0xff]
        %v244 = vld [vmem:[#allocation5 + $0x38] sm:$0xff]
        %v245 = vld [vmem:[#allocation5 + $0x40] sm:$0xff]
        %v246 = vld [vmem:[#allocation5 + $0x48] sm:$0xff]
        %v247 = vld [vmem:[#allocation5 + $0x50] sm:$0xff]
        %v248 = vld [vmem:[#allocation5 + $0x58] sm:$0xff]
        %v249 = vld [vmem:[#allocation5 + $0x60] sm:$0xff]
        %v250 = vld [vmem:[#allocation5 + $0x68] sm:$0xff]
        %v251 = vld [vmem:[#allocation5 + $0x70] sm:$0xff]
        %v252 = vld [vmem:[#allocation5 + $0x78] sm:$0xff]
        %v253 = vld [vmem:[%s235] sm:$0x1]
        %v255 = vlaneseq
        %v256 = vshrl.u32 %v255, 7
        %v257 = vsub.s32 0, %v256
        %v258 = vrot.slane %v253, %v257
        %260 = vmatprep.subr.mxu0 0.0
        %261 = vmatpush1.msra.mxu0 %v237
        %262 = vmatprep.subr.mxu0 0.0
        %263 = vmatpush1.msra.mxu0 %v238
        %264 = vmatprep.subr.mxu0 0.0
        %265 = vmatpush1.msra.mxu0 %v239
        %266 = vmatprep.subr.mxu0 0.0
        %267 = vmatpush1.msra.mxu0 %v240
        %268 = vmatprep.subr.mxu0 0.0
        %269 = vmatpush1.msra.mxu0 %v241
        %270 = vmatprep.subr.mxu0 0.0
        %271 = vmatpush1.msra.mxu0 %v242
        %272 = vmatprep.subr.mxu0 0.0
        %273 = vmatpush1.msra.mxu0 %v243
        %274 = vmatprep.subr.mxu0 0.0
        %275 = vmatpush1.msra.mxu0 %v244
        %276 = vmatprep.subr.mxu0 0.0
        %277 = vmatpush1.msra.mxu0 %v245
        %278 = vmatprep.subr.mxu0 0.0
        %279 = vmatpush1.msra.mxu0 %v246
        %280 = vmatprep.subr.mxu0 0.0
        %281 = vmatpush1.msra.mxu0 %v247
        %282 = vmatprep.subr.mxu0 0.0
        %283 = vmatpush1.msra.mxu0 %v248
        %284 = vmatprep.subr.mxu0 0.0
        %285 = vmatpush1.msra.mxu0 %v249
        %286 = vmatprep.subr.mxu0 0.0
        %287 = vmatpush1.msra.mxu0 %v250
        %288 = vmatprep.subr.mxu0 0.0
        %289 = vmatpush1.msra.mxu0 %v251
        %290 = vmatprep.subr.mxu0 0.0
        %291 = vmatpush1.msra.mxu0 %v252
        %292 = vmatprep.subr.mxu0 0.0
        %293 = vmatpush1.msra.mxu0 0.0
        %294 = vmatprep.subr.mxu0 0.0
        %295 = vmatpush1.msra.mxu0 0.0
        %296 = vmatprep.subr.mxu0 0.0
        %297 = vmatpush1.msra.mxu0 0.0
        %298 = vmatprep.subr.mxu0 0.0
        %299 = vmatpush1.msra.mxu0 0.0
        %300 = vmatprep.subr.mxu0 0.0
        %301 = vmatpush1.msra.mxu0 0.0
        %302 = vmatprep.subr.mxu0 0.0
        %303 = vmatpush1.msra.mxu0 0.0
        %304 = vmatprep.subr.mxu0 0.0
        %305 = vmatpush1.msra.mxu0 0.0
        %306 = vmatprep.subr.mxu0 0.0
        %307 = vmatpush1.msra.mxu0 0.0
        %308 = vmatprep.subr.mxu0 0.0
        %309 = vmatpush1.msra.mxu0 0.0
        %310 = vmatprep.subr.mxu0 0.0
        %311 = vmatpush1.msra.mxu0 0.0
        %312 = vmatprep.subr.mxu0 0.0
        %313 = vmatpush1.msra.mxu0 0.0
        %314 = vmatprep.subr.mxu0 0.0
        %315 = vmatpush1.msra.mxu0 0.0
        %316 = vmatprep.subr.mxu0 0.0
        %317 = vmatpush1.msra.mxu0 0.0
        %318 = vmatprep.subr.mxu0 0.0
        %319 = vmatpush1.msra.mxu0 0.0
        %320 = vmatprep.subr.mxu0 0.0
        %321 = vmatpush1.msra.mxu0 0.0
        %322 = vmatprep.subr.mxu0 0.0
        %323 = vmatpush1.msra.mxu0 0.0
        %324 = vmatprep.mubr.f32.mxu0 0.0
        %325 = vmatmul.mubr.f32.gmra.mrb[0].mxu0 %v236
        %v326 = vpop.f32.mrb[0].mxu0
        %v327 = vadd.f32 %v258, %v326
        %v328 = vpop.f32.mrb[0].mxu0
        %329 = vdwg.mxu0
        %330 = vst [vmem:[%s232] sm:$0xff] %v327
        %s331 = sand.u32 %s121, 1
        %s332 = scalar_lea.sflag [#allocation4], %s331
        %s333 = sand.u32 %s121, 1
        %s334 = smul.addr %s333, 8
        %s335 = scalar_lea.vmem [#allocation7], %s334
        // Predicated region
        $region41: #{tpu_custom_call.1} parent=31 // pred_check
          %p336 = pneg %p131
        $region42: #{tpu_custom_call.1} parent=31 // pred_check_branch
          %338 = sbr.rel (%p336) target = $region44
        $region43: #{tpu_custom_call.1} parent=31 // pred_region
          %s340 = ssub.s32 128, 128
          %341 = vsyncadd %s332, %s340
          %s342 = sadd.s32 %s26, %s25
          %s343 = smul.addr %s342, 128
          %s344 = scalar_lea.hbm %s3, %s343
          %s346 = sshll.u32 %s335, 4
          %s347 = int_to_ptr.vmem [resolvable:$true] %s346
          %349 = dma.vmem_to_hbm [thread:$0]  %s347, 128, %s344, %s332
        $region44: #{tpu_custom_call.1} parent=31 // pred_fallthru
          _
      $region32: #{tpu_custom_call.1} parent=5 // pred_fallthru
        _
      %p350 = scmp.le.s32.totalorder 2, %s16
      // Predicated region
      $region45: #{tpu_custom_call.1} parent=5 // pred_check
        %p351 = pneg %p350
      $region46: #{tpu_custom_call.1} parent=5 // pred_check_branch
        %353 = sbr.rel (%p351) target = $region48
      $region47: #{tpu_custom_call.1} parent=5 // pred_region
        %s354 = ssub.s32 %s16, 2
        // Predicated region
        $region49: #{tpu_custom_call.1} parent=47 // pred_check
          %p355 = pneg %p137
        $region50: #{tpu_custom_call.1} parent=47 // pred_check_branch
          %357 = sbr.rel (%p355) target = $region52
        $region51: #{tpu_custom_call.1} parent=47 // pred_region
          %s358 = sand.u32 %s122, 1
          %s359 = scalar_lea.sflag [#allocation4], %s358
          %s360 = sand.u32 %s122, 1
          %s361 = smul.addr %s360, 8
          %s362 = scalar_lea.vmem [#allocation7], %s361
          %363 = dma.done %s359, 128
        $region52: #{tpu_custom_call.1} parent=47 // pred_fallthru
          _
      $region48: #{tpu_custom_call.1} parent=5 // pred_fallthru
        _
    $region6: #{tpu_custom_call.1} parent=1 // loop_footer
      %s20 = sadd.s32 1, %s16
    $region7: #{tpu_custom_call.1} parent=1 // loop_footer_branch
      %15 = sbr.rel target = $region3
    $region8: #{tpu_custom_call.1} parent=1 // loop_exit
      _
    %364 = vsyncpa [#allocation3], 1
    %s365 = scalar_lea.sflag [#allocation3], 1
    %366 = vsyncpa %s365, 1
    %367 = vsyncpa [#allocation6], 1
    %368 = vsyncpa [#allocation4], 1
    %s369 = scalar_lea.sflag [#allocation4], 1
    %370 = vsyncpa %s369, 1

</llo_original>
